<compile_context>
chip_gen: v5e
topology: v5e:2x2
jax: 0.10.0
libtpu: 0.0.40
codegen_flags: <defaults>
</compile_context>

<pallas_src>
import jax
import jax.numpy as jnp
from jax.experimental import pallas as pl
from jax.experimental.pallas import tpu as pltpu

IN_F = 20
HID_F = 15
OUT_F = 10


def _mlp_l1_kernel(xT_ref, w1_ref, b1_ref, w2_ref, b2_ref, tT_ref,
                   yT_ref, lcol_ref):
    """One batch tile, batch on the lane axis.

    xT_ref: [IN_F,  TB]   w1_ref: [HID_F, IN_F]   b1_ref: [HID_F, 1]
    tT_ref: [OUT_F, TB]   w2_ref: [OUT_F, HID_F]  b2_ref: [OUT_F, 1]
    yT_ref: [OUT_F, TB]   lcol_ref: [1, TB]  (per-column sum of |y - t|)
    """
    xT = xT_ref[...]                                             # [IN_F, TB]
    # layer 1: h^T = relu(W1 @ x^T + b1)
    h = jnp.dot(w1_ref[...], xT,
                preferred_element_type=jnp.float32) + b1_ref[...]
    h = jnp.maximum(h, 0.0)                                      # [HID_F, TB]
    # layer 2: y^T = W2 @ h^T + b2
    y = jnp.dot(w2_ref[...], h.astype(w2_ref.dtype),
                preferred_element_type=jnp.float32) + b2_ref[...]
    yT_ref[...] = y.astype(yT_ref.dtype)                         # [OUT_F, TB]
    # L1 partial: sum over features -> one value per batch column (lane-dense).
    diff = jnp.abs(y - tT_ref[...].astype(jnp.float32))          # [OUT_F, TB]
    lcol_ref[...] = jnp.sum(diff, axis=0, keepdims=True)         # [1, TB]


def _choose_tile(b):
    if b >= 1024:
        return 1024
    if b >= 512:
        return 512
    return 128


@jax.jit
def _forward_arrays(x, t, w1, b1, w2, b2):
    """Array-only forward: returns (y [B,10], loss scalar)."""
    B = x.shape[0]
    TB = _choose_tile(B)
    num_tiles = pl.cdiv(B, TB)
    Bp = num_tiles * TB

    # Batch on the lane axis; pad batch up to a multiple of the tile.
    xT = jnp.pad(x, ((0, Bp - B), (0, 0))).T                     # [IN_F,  Bp]
    tT = jnp.pad(t, ((0, Bp - B), (0, 0))).T                     # [OUT_F, Bp]
    b1c = b1.reshape(HID_F, 1)
    b2c = b2.reshape(OUT_F, 1)

    flops = 2 * B * (IN_F * HID_F + HID_F * OUT_F)
    bytes_accessed = 4 * (B * (IN_F + 2 * OUT_F)
                          + IN_F * HID_F + HID_F * OUT_F + HID_F + OUT_F)

    yT, lcols = pl.pallas_call(
        _mlp_l1_kernel,
        out_shape=(
            jax.ShapeDtypeStruct((OUT_F, Bp), jnp.float32),      # y^T
            jax.ShapeDtypeStruct((1, Bp), jnp.float32),          # per-col |y-t| sums
        ),
        grid=(num_tiles,),
        in_specs=[
            pl.BlockSpec((IN_F, TB), lambda i: (0, i)),          # x^T tile
            pl.BlockSpec((HID_F, IN_F), lambda i: (0, 0)),       # w1 (resident)
            pl.BlockSpec((HID_F, 1), lambda i: (0, 0)),          # b1
            pl.BlockSpec((OUT_F, HID_F), lambda i: (0, 0)),      # w2 (resident)
            pl.BlockSpec((OUT_F, 1), lambda i: (0, 0)),          # b2
            pl.BlockSpec((OUT_F, TB), lambda i: (0, i)),         # t^T tile
        ],
        out_specs=(
            pl.BlockSpec((OUT_F, TB), lambda i: (0, i)),         # y^T tile
            pl.BlockSpec((1, TB), lambda i: (0, i)),             # L1 partials
        ),
        compiler_params=pltpu.CompilerParams(
            dimension_semantics=("parallel",)),
        cost_estimate=pl.CostEstimate(
            flops=flops, transcendentals=0, bytes_accessed=bytes_accessed),
    )(xT, w1, b1c, w2, b2c, tT)

    # Drop padded batch columns, restore [B, OUT_F], finish the mean with the
    # GLOBAL batch size (not the tile size).
    y = yT[:, :B].T
    loss = jnp.sum(lcols[0, :B]) * (1.0 / float(B * OUT_F))
    return y, loss


def model_named_tuple_io_forward(x, t, w1, b1, w2, b2, v="extra"):
    """Returns (y, loss, v) matching ModelNamedTupleIO.forward semantics.

    x:  [B, 20] float32
    t:  [B, 10] float32
    w1: [15, 20] (PyTorch Linear weight layout), b1: [15]
    w2: [10, 15] (PyTorch Linear weight layout), b2: [10]
    v:  passthrough string (kept outside jit / kernel).
    """
    y, loss = _forward_arrays(x, t, w1, b1, w2, b2)
    # TODO(synk): ppe.reporting.report(...) is a host-side logging side effect
    # with no Pallas equivalent; the reported value is just `loss`.
    return y, loss, v


if __name__ == "__main__":
    key = jax.random.PRNGKey(0)
    k_x, k_t, k_w1, k_b1, k_w2, k_b2 = jax.random.split(key, 6)

    # B=300 exercises the batch grid (3 tiles of 128) and padding (300 -> 384).
    B = 300
    x = jax.random.normal(k_x, (B, IN_F), dtype=jnp.float32)
    t = jax.random.normal(k_t, (B, OUT_F), dtype=jnp.float32)

    # Deterministic parameter init in PyTorch Linear layout: [out, in].
    w1 = jax.random.normal(k_w1, (HID_F, IN_F), dtype=jnp.float32) * 0.1
    b1 = jax.random.normal(k_b1, (HID_F,), dtype=jnp.float32) * 0.1
    w2 = jax.random.normal(k_w2, (OUT_F, HID_F), dtype=jnp.float32) * 0.1
    b2 = jax.random.normal(k_b2, (OUT_F,), dtype=jnp.float32) * 0.1

    y, loss, v = model_named_tuple_io_forward(x, t, w1, b1, w2, b2, v="extra")
    jax.block_until_ready((y, loss))

    # Pure-JAX reference check (PyTorch semantics: x @ W^T + b).
    h_ref = jnp.maximum(x @ w1.T + b1, 0.0)
    y_ref = h_ref @ w2.T + b2
    loss_ref = jnp.mean(jnp.abs(y_ref - t))
    assert y.shape == (B, OUT_F)
    assert jnp.allclose(y, y_ref, atol=1e-5, rtol=1e-5)
    assert jnp.allclose(loss, loss_ref, atol=1e-5, rtol=1e-5)
    assert v == "extra"

    print("KERNEL_OK")
</pallas_src>

<mosaic_0001>
module attributes {stable_mosaic.version = 11 : i64} {
  func.func @_mlp_l1_kernel(%arg0: i32, %arg1: memref<20x128xf32, #tpu.memory_space<vmem>>, %arg2: memref<15x20xf32, #tpu.memory_space<vmem>>, %arg3: memref<15x1xf32, #tpu.memory_space<vmem>>, %arg4: memref<10x15xf32, #tpu.memory_space<vmem>>, %arg5: memref<10x1xf32, #tpu.memory_space<vmem>>, %arg6: memref<10x128xf32, #tpu.memory_space<vmem>>, %arg7: memref<10x128xf32, #tpu.memory_space<vmem>>, %arg8: memref<1x128xf32, #tpu.memory_space<vmem>>) attributes {dimension_semantics = [#tpu.dimension_semantics<parallel>], iteration_bounds = array<i64: 3>, scalar_prefetch = 0 : i64, scratch_operands = 0 : i64, tpu.core_type = #tpu.core_type<tc>, window_params = [{transform_indices = @transform_0, window_bounds = array<i64: 20, 128>}, {pipeline_mode = #tpu.pipeline_mode<synchronous>, transform_indices = @transform_1, window_bounds = array<i64: 15, 20>}, {pipeline_mode = #tpu.pipeline_mode<synchronous>, transform_indices = @transform_2, window_bounds = array<i64: 15, 1>}, {pipeline_mode = #tpu.pipeline_mode<synchronous>, transform_indices = @transform_3, window_bounds = array<i64: 10, 15>}, {pipeline_mode = #tpu.pipeline_mode<synchronous>, transform_indices = @transform_4, window_bounds = array<i64: 10, 1>}, {transform_indices = @transform_5, window_bounds = array<i64: 10, 128>}, {transform_indices = @transform_6, window_bounds = array<i64: 10, 128>}, {transform_indices = @transform_7, window_bounds = array<i64: 1, 128>}]} {
    %c0 = arith.constant 0 : index
    %c0_0 = arith.constant 0 : index
    %0 = vector.load %arg1[%c0, %c0_0] : memref<20x128xf32, #tpu.memory_space<vmem>>, vector<20x128xf32>
    %c0_1 = arith.constant 0 : index
    %c0_2 = arith.constant 0 : index
    %1 = vector.load %arg2[%c0_1, %c0_2] : memref<15x20xf32, #tpu.memory_space<vmem>>, vector<15x20xf32>
    %cst = arith.constant dense<0.000000e+00> : vector<15x128xf32>
    %2 = tpu.matmul %1, %0, %cst {dimension_numbers = #tpu.dot_dimension_numbers<[1], [0], [0], [1], [0, 0, 1, 1], [], []>} : vector<15x20xf32>, vector<20x128xf32>, vector<15x128xf32> -> vector<15x128xf32>
    %c0_3 = arith.constant 0 : index
    %c0_4 = arith.constant 0 : index
    %3 = vector.load %arg3[%c0_3, %c0_4] : memref<15x1xf32, #tpu.memory_space<vmem>>, vector<15x1xf32>
    %4 = vector.broadcast %3 : vector<15x1xf32> to vector<15x128xf32>
    %5 = arith.addf %2, %4 : vector<15x128xf32>
    %cst_5 = arith.constant 0.000000e+00 : f32
    %6 = vector.broadcast %cst_5 : f32 to vector<15x128xf32>
    %7 = arith.maximumf %5, %6 : vector<15x128xf32>
    %c0_6 = arith.constant 0 : index
    %c0_7 = arith.constant 0 : index
    %8 = vector.load %arg4[%c0_6, %c0_7] : memref<10x15xf32, #tpu.memory_space<vmem>>, vector<10x15xf32>
    %cst_8 = arith.constant dense<0.000000e+00> : vector<10x128xf32>
    %9 = tpu.matmul %8, %7, %cst_8 {dimension_numbers = #tpu.dot_dimension_numbers<[1], [0], [0], [1], [0, 0, 1, 1], [], []>} : vector<10x15xf32>, vector<15x128xf32>, vector<10x128xf32> -> vector<10x128xf32>
    %c0_9 = arith.constant 0 : index
    %c0_10 = arith.constant 0 : index
    %10 = vector.load %arg5[%c0_9, %c0_10] : memref<10x1xf32, #tpu.memory_space<vmem>>, vector<10x1xf32>
    %11 = vector.broadcast %10 : vector<10x1xf32> to vector<10x128xf32>
    %12 = arith.addf %9, %11 : vector<10x128xf32>
    %c0_11 = arith.constant 0 : index
    %c0_12 = arith.constant 0 : index
    %13 = vector.load %arg7[%c0_11, %c0_12] : memref<10x128xf32, #tpu.memory_space<vmem>>, vector<10x128xf32>
    tpu.vector_store %arg7[%c0_11, %c0_12], %12 {strides = array<i32>} : memref<10x128xf32, #tpu.memory_space<vmem>>, vector<10x128xf32>,
    %c0_13 = arith.constant 0 : index
    %c0_14 = arith.constant 0 : index
    %14 = vector.load %arg6[%c0_13, %c0_14] : memref<10x128xf32, #tpu.memory_space<vmem>>, vector<10x128xf32>
    %15 = arith.subf %12, %14 : vector<10x128xf32>
    %16 = math.absf %15 : vector<10x128xf32>
    %cst_15 = arith.constant dense<0.000000e+00> : vector<128xf32>
    %17 = vector.multi_reduction <add>, %16, %cst_15 [0] : vector<10x128xf32> to vector<128xf32>
    %18 = vector.shape_cast %17 : vector<128xf32> to vector<1x128xf32>
    %c0_16 = arith.constant 0 : index
    %c0_17 = arith.constant 0 : index
    %19 = vector.load %arg8[%c0_16, %c0_17] : memref<1x128xf32, #tpu.memory_space<vmem>>, vector<1x128xf32>
    tpu.vector_store %arg8[%c0_16, %c0_17], %18 {strides = array<i32>} : memref<1x128xf32, #tpu.memory_space<vmem>>, vector<1x128xf32>,
    return
  }
  func.func @transform_0(%arg0: i32) -> (i32, i32) {
    %c0_i32 = arith.constant 0 : i32
    %c0_i32_0 = arith.constant 0 : i32
    return %c0_i32, %arg0 : i32, i32
  }
  func.func @transform_1(%arg0: i32) -> (i32, i32) {
    %c0_i32 = arith.constant 0 : i32
    %c0_i32_0 = arith.constant 0 : i32
    %c0_i32_1 = arith.constant 0 : i32
    return %c0_i32, %c0_i32_0 : i32, i32
  }
  func.func @transform_2(%arg0: i32) -> (i32, i32) {
    %c0_i32 = arith.constant 0 : i32
    %c0_i32_0 = arith.constant 0 : i32
    %c0_i32_1 = arith.constant 0 : i32
    return %c0_i32, %c0_i32_0 : i32, i32
  }
  func.func @transform_3(%arg0: i32) -> (i32, i32) {
    %c0_i32 = arith.constant 0 : i32
    %c0_i32_0 = arith.constant 0 : i32
    %c0_i32_1 = arith.constant 0 : i32
    return %c0_i32, %c0_i32_0 : i32, i32
  }
  func.func @transform_4(%arg0: i32) -> (i32, i32) {
    %c0_i32 = arith.constant 0 : i32
    %c0_i32_0 = arith.constant 0 : i32
    %c0_i32_1 = arith.constant 0 : i32
    return %c0_i32, %c0_i32_0 : i32, i32
  }
  func.func @transform_5(%arg0: i32) -> (i32, i32) {
    %c0_i32 = arith.constant 0 : i32
    %c0_i32_0 = arith.constant 0 : i32
    return %c0_i32, %arg0 : i32, i32
  }
  func.func @transform_6(%arg0: i32) -> (i32, i32) {
    %c0_i32 = arith.constant 0 : i32
    %c0_i32_0 = arith.constant 0 : i32
    return %c0_i32, %arg0 : i32, i32
  }
  func.func @transform_7(%arg0: i32) -> (i32, i32) {
    %c0_i32 = arith.constant 0 : i32
    %c0_i32_0 = arith.constant 0 : i32
    return %c0_i32, %arg0 : i32, i32
  }
}

</mosaic_0001>

<llo_original>
// kernel: _forward_arrays.1
$region0: #{_forward_arrays.1}
  #allocation0 [shape = 'u32[]', space=smem, size = 0x4, offset = 0x4, fixed_abs, tag = 'smem constant byte address 0x4 - core index']
  #allocation1 [shape = 'u32[72,128]{1,0:T(1,128)}', space=vmem, size = 0x9000, scoped, tag = 'internal scratch']
  %s0 = inlined_call_operand.vmem [shape: f32[20,384], index: 0, kind: input, shape index: {}]
  %s1 = inlined_call_operand.vmem [shape: f32[15,20], index: 1, kind: input, shape index: {}]
  %s2 = inlined_call_operand.vmem [shape: f32[15,1], index: 2, kind: input, shape index: {}]
  %s3 = inlined_call_operand.vmem [shape: f32[10,15], index: 3, kind: input, shape index: {}]
  %s4 = inlined_call_operand.vmem [shape: f32[10,1], index: 4, kind: input, shape index: {}]
  %s5 = inlined_call_operand.vmem [shape: f32[10,384], index: 5, kind: input, shape index: {}]
  %s6 = inlined_call_operand.vmem [shape: f32[10,384], index: 6, kind: output, shape index: {0}]
  %s7 = inlined_call_operand.vmem [shape: f32[1,384], index: 7, kind: output, shape index: {1}]
  %8 = xla_tuple %s6, %s7
  %s9 = sld [smem:[#allocation0]]
  $region175: #{_forward_arrays.1} parent=0
    _
  %s11 = ssub.s32 1, %s9
  %s12 = scalar_select 0, %s11, %s9
  $region1: #{_forward_arrays.1} parent=0
    #allocation2 [shape = 'u8[24576]{0}', space=vmem, size = 0x6000, scoped, tag = 'input window, operand 0']
    #allocation3 [shape = 'u8[16384]{0}', space=vmem, size = 0x4000, scoped, tag = 'input window, operand 5']
    #allocation4 [shape = 'u8[16384]{0}', space=vmem, size = 0x4000, scoped, tag = 'output window, operand 0']
    loop: start=0, step=1, limit=5
    $region2: #{_forward_arrays.1} parent=1 // loop_pre_header
      _
    $region3: #{_forward_arrays.1} parent=1 // loop_header
      %s14 = sphi 0, %s18
      %p15 = scmp.ge.s32.totalorder %s14, 5
      %s24 = sphi 0, %s26
      %s27 = sphi 0, %s24
      %s28 = sphi 0, %s27
      %s44 = sphi 0, %s28
      %s48 = sphi 0, %s48
      %s50 = sphi 0, %s48
      %s51 = sphi 0, %s50
      %s65 = sphi 0, %s51
      %s69 = sphi 0, %s69
      %s71 = sphi 0, %s69
      %s72 = sphi 0, %s71
      %s86 = sphi 0, %s72
      %s90 = sphi 0, %s90
      %s92 = sphi 0, %s90
      %s93 = sphi 0, %s92
      %s107 = sphi 0, %s93
      %s111 = sphi 0, %s111
      %s113 = sphi 0, %s111
      %s114 = sphi 0, %s113
      %s128 = sphi 0, %s114
      %s134 = sphi 0, %s136
      %s137 = sphi 0, %s134
      %s138 = sphi 0, %s137
      %s154 = sphi 0, %s138
      %s160 = sphi 0, %s162
      %s163 = sphi 0, %s160
      %s164 = sphi 0, %s163
      %s180 = sphi 0, %s164
      %s186 = sphi 0, %s188
      %s189 = sphi 0, %s186
      %s190 = sphi 0, %s189
      %s206 = sphi 0, %s190
    $region4: #{_forward_arrays.1} parent=1 // loop_header_branch
      %17 = sbr.rel (%p15) target = $region8
    $region5: #{_forward_arrays.1} parent=1 // loop_body
      %s19 = ssub.s32 %s14, 1
      %s20 = ssub.s32 %s14, 2
      %s21 = sadd.s32 %s14, 1
      %s22 = ssub.s32 %s14, %s21
      %p23 = scmp.eq.s32.totalorder %s22, 0
      %s25 = sadd.s32 %s24, 1
      %s26 = scalar_select %p23, %s24, %s25
      %p29 = pneg %p23
      %p30 = scmp.eq.s32.totalorder %s14, 2
      %p31 = por %p29, %p30
      %p32 = scmp.ne.s32.totalorder %s24, %s27
      %p33 = scmp.eq.s32.totalorder %s14, 0
      %p34 = por %p32, %p33
      %p35 = scmp.ne.s32.totalorder %s24, %s27
      %p36 = scmp.eq.s32.totalorder %s19, 2
      %p37 = por %p35, %p36
      %p38 = scmp.ne.s32.totalorder %s27, %s28
      %p39 = scmp.eq.s32.totalorder %s19, 0
      %p40 = por %p38, %p39
      %p41 = scmp.ne.s32.totalorder %s27, %s28
      %p42 = scmp.eq.s32.totalorder %s20, 2
      %p43 = por %p41, %p42
      %p45 = scmp.ne.s32.totalorder %s28, %s44
      %p46 = scmp.eq.s32.totalorder %s20, 0
      %p47 = por %p45, %p46
      %s49 = sadd.s32 %s48, 1
      %p52 = scmp.eq.s32.totalorder %s14, 2
      %p53 = scmp.ne.s32.totalorder %s48, %s50
      %p54 = scmp.eq.s32.totalorder %s14, 0
      %p55 = por %p53, %p54
      %p56 = scmp.ne.s32.totalorder %s48, %s50
      %p57 = scmp.eq.s32.totalorder %s19, 2
      %p58 = por %p56, %p57
      %p59 = scmp.ne.s32.totalorder %s50, %s51
      %p60 = scmp.eq.s32.totalorder %s19, 0
      %p61 = por %p59, %p60
      %p62 = scmp.ne.s32.totalorder %s50, %s51
      %p63 = scmp.eq.s32.totalorder %s20, 2
      %p64 = por %p62, %p63
      %p66 = scmp.ne.s32.totalorder %s51, %s65
      %p67 = scmp.eq.s32.totalorder %s20, 0
      %p68 = por %p66, %p67
      %s70 = sadd.s32 %s69, 1
      %p73 = scmp.eq.s32.totalorder %s14, 2
      %p74 = scmp.ne.s32.totalorder %s69, %s71
      %p75 = scmp.eq.s32.totalorder %s14, 0
      %p76 = por %p74, %p75
      %p77 = scmp.ne.s32.totalorder %s69, %s71
      %p78 = scmp.eq.s32.totalorder %s19, 2
      %p79 = por %p77, %p78
      %p80 = scmp.ne.s32.totalorder %s71, %s72
      %p81 = scmp.eq.s32.totalorder %s19, 0
      %p82 = por %p80, %p81
      %p83 = scmp.ne.s32.totalorder %s71, %s72
      %p84 = scmp.eq.s32.totalorder %s20, 2
      %p85 = por %p83, %p84
      %p87 = scmp.ne.s32.totalorder %s72, %s86
      %p88 = scmp.eq.s32.totalorder %s20, 0
      %p89 = por %p87, %p88
      %s91 = sadd.s32 %s90, 1
      %p94 = scmp.eq.s32.totalorder %s14, 2
      %p95 = scmp.ne.s32.totalorder %s90, %s92
      %p96 = scmp.eq.s32.totalorder %s14, 0
      %p97 = por %p95, %p96
      %p98 = scmp.ne.s32.totalorder %s90, %s92
      %p99 = scmp.eq.s32.totalorder %s19, 2
      %p100 = por %p98, %p99
      %p101 = scmp.ne.s32.totalorder %s92, %s93
      %p102 = scmp.eq.s32.totalorder %s19, 0
      %p103 = por %p101, %p102
      %p104 = scmp.ne.s32.totalorder %s92, %s93
      %p105 = scmp.eq.s32.totalorder %s20, 2
      %p106 = por %p104, %p105
      %p108 = scmp.ne.s32.totalorder %s93, %s107
      %p109 = scmp.eq.s32.totalorder %s20, 0
      %p110 = por %p108, %p109
      %s112 = sadd.s32 %s111, 1
      %p115 = scmp.eq.s32.totalorder %s14, 2
      %p116 = scmp.ne.s32.totalorder %s111, %s113
      %p117 = scmp.eq.s32.totalorder %s14, 0
      %p118 = por %p116, %p117
      %p119 = scmp.ne.s32.totalorder %s111, %s113
      %p120 = scmp.eq.s32.totalorder %s19, 2
      %p121 = por %p119, %p120
      %p122 = scmp.ne.s32.totalorder %s113, %s114
      %p123 = scmp.eq.s32.totalorder %s19, 0
      %p124 = por %p122, %p123
      %p125 = scmp.ne.s32.totalorder %s113, %s114
      %p126 = scmp.eq.s32.totalorder %s20, 2
      %p127 = por %p125, %p126
      %p129 = scmp.ne.s32.totalorder %s114, %s128
      %p130 = scmp.eq.s32.totalorder %s20, 0
      %p131 = por %p129, %p130
      %s132 = ssub.s32 %s14, %s21
      %p133 = scmp.eq.s32.totalorder %s132, 0
      %s135 = sadd.s32 %s134, 1
      %s136 = scalar_select %p133, %s134, %s135
      %p139 = pneg %p133
      %p140 = scmp.eq.s32.totalorder %s14, 2
      %p141 = por %p139, %p140
      %p142 = scmp.ne.s32.totalorder %s134, %s137
      %p143 = scmp.eq.s32.totalorder %s14, 0
      %p144 = por %p142, %p143
      %p145 = scmp.ne.s32.totalorder %s134, %s137
      %p146 = scmp.eq.s32.totalorder %s19, 2
      %p147 = por %p145, %p146
      %p148 = scmp.ne.s32.totalorder %s137, %s138
      %p149 = scmp.eq.s32.totalorder %s19, 0
      %p150 = por %p148, %p149
      %p151 = scmp.ne.s32.totalorder %s137, %s138
      %p152 = scmp.eq.s32.totalorder %s20, 2
      %p153 = por %p151, %p152
      %p155 = scmp.ne.s32.totalorder %s138, %s154
      %p156 = scmp.eq.s32.totalorder %s20, 0
      %p157 = por %p155, %p156
      %s158 = ssub.s32 %s14, %s21
      %p159 = scmp.eq.s32.totalorder %s158, 0
      %s161 = sadd.s32 %s160, 1
      %s162 = scalar_select %p159, %s160, %s161
      %p165 = pneg %p159
      %p166 = scmp.eq.s32.totalorder %s14, 2
      %p167 = por %p165, %p166
      %p168 = scmp.ne.s32.totalorder %s160, %s163
      %p169 = scmp.eq.s32.totalorder %s14, 0
      %p170 = por %p168, %p169
      %p171 = scmp.ne.s32.totalorder %s160, %s163
      %p172 = scmp.eq.s32.totalorder %s19, 2
      %p173 = por %p171, %p172
      %p174 = scmp.ne.s32.totalorder %s163, %s164
      %p175 = scmp.eq.s32.totalorder %s19, 0
      %p176 = por %p174, %p175
      %p177 = scmp.ne.s32.totalorder %s163, %s164
      %p178 = scmp.eq.s32.totalorder %s20, 2
      %p179 = por %p177, %p178
      %p181 = scmp.ne.s32.totalorder %s164, %s180
      %p182 = scmp.eq.s32.totalorder %s20, 0
      %p183 = por %p181, %p182
      %s184 = ssub.s32 %s14, %s21
      %p185 = scmp.eq.s32.totalorder %s184, 0
      %s187 = sadd.s32 %s186, 1
      %s188 = scalar_select %p185, %s186, %s187
      %p191 = pneg %p185
      %p192 = scmp.eq.s32.totalorder %s14, 2
      %p193 = por %p191, %p192
      %p194 = scmp.ne.s32.totalorder %s186, %s189
      %p195 = scmp.eq.s32.totalorder %s14, 0
      %p196 = por %p194, %p195
      %p197 = scmp.ne.s32.totalorder %s186, %s189
      %p198 = scmp.eq.s32.totalorder %s19, 2
      %p199 = por %p197, %p198
      %p200 = scmp.ne.s32.totalorder %s189, %s190
      %p201 = scmp.eq.s32.totalorder %s19, 0
      %p202 = por %p200, %p201
      %p203 = scmp.ne.s32.totalorder %s189, %s190
      %p204 = scmp.eq.s32.totalorder %s20, 2
      %p205 = por %p203, %p204
      %p207 = scmp.ne.s32.totalorder %s190, %s206
      %p208 = scmp.eq.s32.totalorder %s20, 0
      %p209 = por %p207, %p208
      %p210 = scmp.le.s32.totalorder 1, %s14
      %p211 = scmp.lt.s32.totalorder %s14, 4
      %p212 = pnand %p210, %p211
      %p213 = pneg %p212
      // Predicated region
      $region9: #{_forward_arrays.1} parent=5 // pred_check
        _
      $region10: #{_forward_arrays.1} parent=5 // pred_check_branch
        %215 = sbr.rel (%p212) target = $region12
      $region11: #{_forward_arrays.1} parent=5 // pred_region
        %s216 = ssub.s32 %s14, 1
        // Predicated region
        $region13: #{_forward_arrays.1} parent=11 // pred_check
          %p217 = pneg %p61
        $region14: #{_forward_arrays.1} parent=11 // pred_check_branch
          %219 = sbr.rel (%p217) target = $region16
        $region15: #{_forward_arrays.1} parent=11 // pred_region
          _
        $region16: #{_forward_arrays.1} parent=11 // pred_fallthru
          _
        // Predicated region
        $region17: #{_forward_arrays.1} parent=11 // pred_check
          %p220 = pneg %p82
        $region18: #{_forward_arrays.1} parent=11 // pred_check_branch
          %222 = sbr.rel (%p220) target = $region20
        $region19: #{_forward_arrays.1} parent=11 // pred_region
          _
        $region20: #{_forward_arrays.1} parent=11 // pred_fallthru
          _
        // Predicated region
        $region21: #{_forward_arrays.1} parent=11 // pred_check
          %p223 = pneg %p103
        $region22: #{_forward_arrays.1} parent=11 // pred_check_branch
          %225 = sbr.rel (%p223) target = $region24
        $region23: #{_forward_arrays.1} parent=11 // pred_region
          _
        $region24: #{_forward_arrays.1} parent=11 // pred_fallthru
          _
        // Predicated region
        $region25: #{_forward_arrays.1} parent=11 // pred_check
          %p226 = pneg %p124
        $region26: #{_forward_arrays.1} parent=11 // pred_check_branch
          %228 = sbr.rel (%p226) target = $region28
        $region27: #{_forward_arrays.1} parent=11 // pred_region
          _
        $region28: #{_forward_arrays.1} parent=11 // pred_fallthru
          _
      $region12: #{_forward_arrays.1} parent=5 // pred_fallthru
        _
      %p229 = scmp.lt.s32.totalorder %s14, 3
      // Predicated region
      $region29: #{_forward_arrays.1} parent=5 // pred_check
        %p230 = pneg %p229
      $region30: #{_forward_arrays.1} parent=5 // pred_check_branch
        %232 = sbr.rel (%p230) target = $region32
      $region31: #{_forward_arrays.1} parent=5 // pred_region
        // Predicated region
        $region33: #{_forward_arrays.1} parent=31 // pred_check
          %p233 = pneg %p34
        $region34: #{_forward_arrays.1} parent=31 // pred_check_branch
          %235 = sbr.rel (%p233) target = $region36
        $region35: #{_forward_arrays.1} parent=31 // pred_region
          %s236 = sand.u32 %s24, 1
          %s237 = sand.u32 %s24, 1
          %s238 = smul.addr %s237, 24
          %s239 = scalar_lea.vmem [#allocation2], %s238
          %s240 = smul.addr %s14, 8
          %s241 = scalar_lea.vmem %s0, %s240
          // Predicated region
          $region37: #{_forward_arrays.1} parent=35 // pred_check
            _
          $region38: #{_forward_arrays.1} parent=35 // pred_check_branch
            %243 = sbr.rel (0) target = $region40
          $region39: #{_forward_arrays.1} parent=35 // pred_region
            // Predicated region
            $region41: #{_forward_arrays.1} parent=39 // pred_check
              _
            $region42: #{_forward_arrays.1} parent=39 // pred_check_branch
              %245 = sbr.rel (0) target = $region44
            $region43: #{_forward_arrays.1} parent=39 // pred_region
              // Predicated region
              $region56: #{_forward_arrays.1} parent=43 // pred_check
                _
              $region57: #{_forward_arrays.1} parent=43 // pred_check_branch
                %265 = sbr.rel (0) target = $region59
              $region58: #{_forward_arrays.1} parent=43 // pred_region
                loop: start=0, step=1, limit=1
                $region60: #{_forward_arrays.1} parent=58 // loop_pre_header
                  _
                $region61: #{_forward_arrays.1} parent=58 // loop_header
                  %s267 = sphi 0, %s271
                  %p268 = scmp.ge.s32.totalorder %s267, 1
                  %s272 = sphi %s241, %s241
                  %s273 = sphi %s239, %s239
                $region62: #{_forward_arrays.1} parent=58 // loop_header_branch
                  %270 = sbr.rel (%p268) target = $region66
                $region63: #{_forward_arrays.1} parent=58 // loop_body
                  %v274 = vld [vmem:[%s272] sm:$0xff]
                  %275 = vst [vmem:[%s273] sm:$0xff] %v274
                  %v276 = vld [vmem:[%s272 + $0x18] sm:$0xff]
                  %277 = vst [vmem:[%s273 + $0x8] sm:$0xff] %v276
                  %v278 = vld [vmem:[%s272 + $0x30] sm:$0xff]
                  %279 = vst [vmem:[%s273 + $0x10] sm:$0xff] %v278
                $region64: #{_forward_arrays.1} parent=58 // loop_footer
                  %s271 = sadd.s32 1, %s267
                $region65: #{_forward_arrays.1} parent=58 // loop_footer_branch
                  %266 = sbr.rel target = $region61
                $region66: #{_forward_arrays.1} parent=58 // loop_exit
                  _
              $region59: #{_forward_arrays.1} parent=43 // pred_fallthru
                _
              // Predicated region
              $region67: #{_forward_arrays.1} parent=43 // pred_check
                _
              $region68: #{_forward_arrays.1} parent=43 // pred_check_branch
                %281 = sbr.rel target = $region70
              $region69: #{_forward_arrays.1} parent=43 // pred_region
                _
              $region70: #{_forward_arrays.1} parent=43 // pred_fallthru
                _
            $region44: #{_forward_arrays.1} parent=39 // pred_fallthru
              _
            // Predicated region
            $region45: #{_forward_arrays.1} parent=39 // pred_check
              _
            $region46: #{_forward_arrays.1} parent=39 // pred_check_branch
              %247 = sbr.rel target = $region48
            $region47: #{_forward_arrays.1} parent=39 // pred_region
              %s249 = ssub.s32 256, 1
              loop: start=0, step=1, limit=1
              $region49: #{_forward_arrays.1} parent=47 // loop_pre_header
                _
              $region50: #{_forward_arrays.1} parent=47 // loop_header
                %s251 = sphi 0, %s255
                %p252 = scmp.ge.s32.totalorder %s251, 1
                %s256 = sphi %s241, %s241
                %s257 = sphi %s239, %s239
              $region51: #{_forward_arrays.1} parent=47 // loop_header_branch
                %254 = sbr.rel (%p252) target = $region55
              $region52: #{_forward_arrays.1} parent=47 // loop_body
                %v258 = vld [vmem:[%s256] sm:%s249]
                %259 = vst [vmem:[%s257] sm:%s249] %v258
                %v260 = vld [vmem:[%s256 + $0x18] sm:%s249]
                %261 = vst [vmem:[%s257 + $0x8] sm:%s249] %v260
                %v262 = vld [vmem:[%s256 + $0x30] sm:%s249]
                %263 = vst [vmem:[%s257 + $0x10] sm:%s249] %v262
              $region53: #{_forward_arrays.1} parent=47 // loop_footer
                %s255 = sadd.s32 1, %s251
              $region54: #{_forward_arrays.1} parent=47 // loop_footer_branch
                %250 = sbr.rel target = $region50
              $region55: #{_forward_arrays.1} parent=47 // loop_exit
                _
            $region48: #{_forward_arrays.1} parent=39 // pred_fallthru
              _
          $region40: #{_forward_arrays.1} parent=35 // pred_fallthru
            _
          %282 = vnop
        $region36: #{_forward_arrays.1} parent=31 // pred_fallthru
          _
        // Predicated region
        $region71: #{_forward_arrays.1} parent=31 // pred_check
          %p283 = pneg %p144
        $region72: #{_forward_arrays.1} parent=31 // pred_check_branch
          %285 = sbr.rel (%p283) target = $region74
        $region73: #{_forward_arrays.1} parent=31 // pred_region
          %s286 = sand.u32 %s134, 1
          %s287 = sand.u32 %s134, 1
          %s288 = smul.addr %s287, 16
          %s289 = scalar_lea.vmem [#allocation3], %s288
          %s290 = smul.addr %s14, 8
          %s291 = scalar_lea.vmem %s5, %s290
          // Predicated region
          $region75: #{_forward_arrays.1} parent=73 // pred_check
            _
          $region76: #{_forward_arrays.1} parent=73 // pred_check_branch
            %293 = sbr.rel (0) target = $region78
          $region77: #{_forward_arrays.1} parent=73 // pred_region
            // Predicated region
            $region79: #{_forward_arrays.1} parent=77 // pred_check
              _
            $region80: #{_forward_arrays.1} parent=77 // pred_check_branch
              %295 = sbr.rel (0) target = $region82
            $region81: #{_forward_arrays.1} parent=77 // pred_region
              // Predicated region
              $region94: #{_forward_arrays.1} parent=81 // pred_check
                _
              $region95: #{_forward_arrays.1} parent=81 // pred_check_branch
                %313 = sbr.rel (0) target = $region97
              $region96: #{_forward_arrays.1} parent=81 // pred_region
                loop: start=0, step=1, limit=1
                $region98: #{_forward_arrays.1} parent=96 // loop_pre_header
                  _
                $region99: #{_forward_arrays.1} parent=96 // loop_header
                  %s315 = sphi 0, %s319
                  %p316 = scmp.ge.s32.totalorder %s315, 1
                  %s320 = sphi %s291, %s291
                  %s321 = sphi %s289, %s289
                $region100: #{_forward_arrays.1} parent=96 // loop_header_branch
                  %318 = sbr.rel (%p316) target = $region104
                $region101: #{_forward_arrays.1} parent=96 // loop_body
                  %v322 = vld [vmem:[%s320] sm:$0xff]
                  %323 = vst [vmem:[%s321] sm:$0xff] %v322
                  %v324 = vld [vmem:[%s320 + $0x18] sm:$0xff]
                  %325 = vst [vmem:[%s321 + $0x8] sm:$0xff] %v324
                $region102: #{_forward_arrays.1} parent=96 // loop_footer
                  %s319 = sadd.s32 1, %s315
                $region103: #{_forward_arrays.1} parent=96 // loop_footer_branch
                  %314 = sbr.rel target = $region99
                $region104: #{_forward_arrays.1} parent=96 // loop_exit
                  _
              $region97: #{_forward_arrays.1} parent=81 // pred_fallthru
                _
              // Predicated region
              $region105: #{_forward_arrays.1} parent=81 // pred_check
                _
              $region106: #{_forward_arrays.1} parent=81 // pred_check_branch
                %327 = sbr.rel target = $region108
              $region107: #{_forward_arrays.1} parent=81 // pred_region
                _
              $region108: #{_forward_arrays.1} parent=81 // pred_fallthru
                _
            $region82: #{_forward_arrays.1} parent=77 // pred_fallthru
              _
            // Predicated region
            $region83: #{_forward_arrays.1} parent=77 // pred_check
              _
            $region84: #{_forward_arrays.1} parent=77 // pred_check_branch
              %297 = sbr.rel target = $region86
            $region85: #{_forward_arrays.1} parent=77 // pred_region
              %s299 = ssub.s32 256, 1
              loop: start=0, step=1, limit=1
              $region87: #{_forward_arrays.1} parent=85 // loop_pre_header
                _
              $region88: #{_forward_arrays.1} parent=85 // loop_header
                %s301 = sphi 0, %s305
                %p302 = scmp.ge.s32.totalorder %s301, 1
                %s306 = sphi %s291, %s291
                %s307 = sphi %s289, %s289
              $region89: #{_forward_arrays.1} parent=85 // loop_header_branch
                %304 = sbr.rel (%p302) target = $region93
              $region90: #{_forward_arrays.1} parent=85 // loop_body
                %v308 = vld [vmem:[%s306] sm:%s299]
                %309 = vst [vmem:[%s307] sm:%s299] %v308
                %v310 = vld [vmem:[%s306 + $0x18] sm:%s299]
                %311 = vst [vmem:[%s307 + $0x8] sm:%s299] %v310
              $region91: #{_forward_arrays.1} parent=85 // loop_footer
                %s305 = sadd.s32 1, %s301
              $region92: #{_forward_arrays.1} parent=85 // loop_footer_branch
                %300 = sbr.rel target = $region88
              $region93: #{_forward_arrays.1} parent=85 // loop_exit
                _
            $region86: #{_forward_arrays.1} parent=77 // pred_fallthru
              _
          $region78: #{_forward_arrays.1} parent=73 // pred_fallthru
            _
          %328 = vnop
        $region74: #{_forward_arrays.1} parent=31 // pred_fallthru
          _
      $region32: #{_forward_arrays.1} parent=5 // pred_fallthru
        _
      %p329 = scmp.le.s32.totalorder 1, %s14
      %p330 = scmp.lt.s32.totalorder %s14, 4
      %p331 = pnand %p329, %p330
      %p332 = pneg %p331
      // Predicated region
      $region109: #{_forward_arrays.1} parent=5 // pred_check
        _
      $region110: #{_forward_arrays.1} parent=5 // pred_check_branch
        %334 = sbr.rel (%p331) target = $region112
      $region111: #{_forward_arrays.1} parent=5 // pred_region
        %s335 = ssub.s32 %s14, 1
        %s336 = sand.u32 %s27, 1
        %s337 = sand.u32 %s27, 1
        %s338 = smul.addr %s337, 24
        %s339 = scalar_lea.vmem [#allocation2], %s338
        // Predicated region
        $region113: #{_forward_arrays.1} parent=111 // pred_check
          %p340 = pneg %p40
        $region114: #{_forward_arrays.1} parent=111 // pred_check_branch
          %342 = sbr.rel (%p340) target = $region116
        $region115: #{_forward_arrays.1} parent=111 // pred_region
          _
        $region116: #{_forward_arrays.1} parent=111 // pred_fallthru
          _
        %s343 = sand.u32 %s137, 1
        %s344 = sand.u32 %s137, 1
        %s345 = smul.addr %s344, 16
        %s346 = scalar_lea.vmem [#allocation3], %s345
        // Predicated region
        $region117: #{_forward_arrays.1} parent=111 // pred_check
          %p347 = pneg %p150
        $region118: #{_forward_arrays.1} parent=111 // pred_check_branch
          %349 = sbr.rel (%p347) target = $region120
        $region119: #{_forward_arrays.1} parent=111 // pred_region
          _
        $region120: #{_forward_arrays.1} parent=111 // pred_fallthru
          _
        %s350 = sand.u32 %s27, 1
        %s351 = sand.u32 %s27, 1
        %s352 = smul.addr %s351, 24
        %s353 = scalar_lea.vmem [#allocation2], %s352
        %p354 = pneg %p40
        %p355 = pneg %p37
        %p356 = pneg %p61
        %p357 = pneg %p58
        %p358 = pneg %p82
        %p359 = pneg %p79
        %p360 = pneg %p103
        %p361 = pneg %p100
        %p362 = pneg %p124
        %p363 = pneg %p121
        %s364 = sand.u32 %s137, 1
        %s365 = sand.u32 %s137, 1
        %s366 = smul.addr %s365, 16
        %s367 = scalar_lea.vmem [#allocation3], %s366
        %p368 = pneg %p150
        %p369 = pneg %p147
        %p370 = pneg %p176
        %p371 = pneg %p173
        %s372 = sand.u32 %s163, 1
        %s373 = sand.u32 %s163, 1
        %s374 = smul.addr %s373, 16
        %s375 = scalar_lea.vmem [#allocation4], %s374
        %p376 = pneg %p202
        %p377 = pneg %p199
        %p378 = scmp.lt.s32.totalorder %s19, 2
        %s379 = scalar_select %p378, %s19, 2
        %s380 = scalar_lea.vmem %s7, %s379
        %p381 = scmp.lt.s32.totalorder %s19, 2
        %s382 = scalar_select %p381, %s19, 2
        %s383 = scalar_lea.vmem %s7, %s382
        %v384 = vld [vmem:[%s339] sm:$0xff]
        %v385 = vld [vmem:[%s339 + $0x8] sm:$0xff]
        %v386 = vld [vmem:[%s339 + $0x10] sm:$0xf]
        %v387 = vld [vmem:[%s1] sm:$0xff]
        %v388 = vld [vmem:[%s1 + $0x8] sm:$0x7f]
        %v389 = vld [vmem:[%s2] sm:$0xff]
        %v390 = vld [vmem:[%s2 + $0x8] sm:$0x7f]
        %392 = vset.pattern.permute.xlu0 0
        %393 = vperm.xlu0 %392, %v389
        %v394 = vpop.permute.xlu0 %393
        %397 = vset.pattern.permute.xlu0 0
        %398 = vperm.xlu0 %397, %v390
        %v399 = vpop.permute.xlu0 %398
        %vm401 = vcmask 162816
        %v403 = vsel %vm401, %v387, 0
        %v406 = vsel %vm401, %v388, 0
        %vm408 = vcmask 1043456
        %v410 = vsel %vm408, %v386, 0
        %412 = vmatpush.msra.mxu0 0.0
        %413 = vmatpush.msra.mxu0 0.0
        %414 = vmatpush.msra.mxu0 0.0
        %415 = vmatpush.msra.mxu0 0.0
        %416 = vmatpush.msra.mxu0 0.0
        %417 = vmatpush.msra.mxu0 0.0
        %418 = vmatpush.msra.mxu0 0.0
        %419 = vmatpush.msra.mxu0 0.0
        %420 = vmatpush.msra.mxu0 0.0
        %421 = vmatpush.msra.mxu0 0.0
        %422 = vmatpush.msra.mxu0 0.0
        %423 = vmatpush.msra.mxu0 0.0
        %424 = vmatpush.msra.mxu0 0.0
        %425 = vmatpush.msra.mxu0 %v410
        %426 = vmatpush.msra.mxu0 %v385
        %427 = vmatpush.msra.mxu0 %v384
        %428 = vmatmul.f32.gmra.mxu0 %v403
        %v429 = vpop.f32.mrf.mxu0
        %v430 = vadd.f32 %v394, %v429
        %431 = vmatmul.f32.gmra.mxu0 %v406
        %v432 = vpop.f32.mrf.mxu0
        %v433 = vadd.f32 %v399, %v432
        %434 = vdwg.mxu0
        %v435 = vmax.f32 %v430, 0.0
        %v436 = vmax.f32 %v433, 0.0
        %v437 = vld [vmem:[%s3] sm:$0xff]
        %v438 = vld [vmem:[%s3 + $0x8] sm:$0x3]
        %v439 = vld [vmem:[%s4] sm:$0xff]
        %v440 = vld [vmem:[%s4 + $0x8] sm:$0x3]
        %442 = vset.pattern.permute.xlu0 0
        %443 = vperm.xlu0 %442, %v439
        %v444 = vpop.permute.xlu0 %443
        %447 = vset.pattern.permute.xlu0 0
        %448 = vperm.xlu0 %447, %v440
        %v449 = vpop.permute.xlu0 %448
        %vm451 = vcmask 121856
        %v453 = vsel %vm451, %v437, 0
        %v456 = vsel %vm451, %v438, 0
        %vm458 = vcmask 1046528
        %v460 = vsel %vm458, %v436, 0
        %462 = vmatpush.msra.mxu0 0.0
        %463 = vmatpush.msra.mxu0 0.0
        %464 = vmatpush.msra.mxu0 0.0
        %465 = vmatpush.msra.mxu0 0.0
        %466 = vmatpush.msra.mxu0 0.0
        %467 = vmatpush.msra.mxu0 0.0
        %468 = vmatpush.msra.mxu0 0.0
        %469 = vmatpush.msra.mxu0 0.0
        %470 = vmatpush.msra.mxu0 0.0
        %471 = vmatpush.msra.mxu0 0.0
        %472 = vmatpush.msra.mxu0 0.0
        %473 = vmatpush.msra.mxu0 0.0
        %474 = vmatpush.msra.mxu0 0.0
        %475 = vmatpush.msra.mxu0 0.0
        %476 = vmatpush.msra.mxu0 %v460
        %477 = vmatpush.msra.mxu0 %v435
        %478 = vmatmul.f32.gmra.mxu0 %v453
        %v479 = vpop.f32.mrf.mxu0
        %v480 = vadd.f32 %v444, %v479
        %481 = vmatmul.f32.gmra.mxu0 %v456
        %v482 = vpop.f32.mrf.mxu0
        %v483 = vadd.f32 %v449, %v482
        %484 = vdwg.mxu0
        %485 = vst [vmem:[%s375] sm:$0xff] %v480
        %486 = vst [vmem:[%s375 + $0x8] sm:$0x3] %v483
        %v487 = vld [vmem:[%s346] sm:$0xff]
        %v488 = vld [vmem:[%s346 + $0x8] sm:$0x3]
        %v489 = vsub.f32 %v480, %v487
        %v490 = vsub.f32 %v483, %v488
        %v491 = vand.u32 2147483647, %v489
        %v492 = vand.u32 2147483647, %v490
        %vm493 = vcmask 1041408
        %v494 = vsel %vm493, %v492, 0.0
        %v495 = vadd.f32 %v491, %v494
        %v496 = vrot.slane %v495, 4
        %v497 = vadd.f32 %v495, %v496
        %v498 = vrot.slane %v497, 2
        %v499 = vadd.f32 %v497, %v498
        %v500 = vrot.slane %v499, 1
        %v501 = vadd.f32 %v499, %v500
        %502 = vst [vmem:[%s383] sm:$0x1] %v501
        %s503 = sand.u32 %s163, 1
        %s504 = sand.u32 %s163, 1
        %s505 = smul.addr %s504, 16
        %s506 = scalar_lea.vmem [#allocation4], %s505
        %p507 = scmp.lt.s32.totalorder %s19, 2
        %s508 = scalar_select %p507, %s19, 2
        %s509 = scalar_lea.vmem %s7, %s508
        // Predicated region
        $region121: #{_forward_arrays.1} parent=111 // pred_check
          %p510 = pneg %p173
        $region122: #{_forward_arrays.1} parent=111 // pred_check_branch
          %512 = sbr.rel (%p510) target = $region124
        $region123: #{_forward_arrays.1} parent=111 // pred_region
          %s513 = smul.addr %s19, 8
          %s514 = scalar_lea.vmem %s6, %s513
          // Predicated region
          $region125: #{_forward_arrays.1} parent=123 // pred_check
            _
          $region126: #{_forward_arrays.1} parent=123 // pred_check_branch
            %516 = sbr.rel (0) target = $region128
          $region127: #{_forward_arrays.1} parent=123 // pred_region
            // Predicated region
            $region129: #{_forward_arrays.1} parent=127 // pred_check
              _
            $region130: #{_forward_arrays.1} parent=127 // pred_check_branch
              %518 = sbr.rel (0) target = $region132
            $region131: #{_forward_arrays.1} parent=127 // pred_region
              // Predicated region
              $region144: #{_forward_arrays.1} parent=131 // pred_check
                _
              $region145: #{_forward_arrays.1} parent=131 // pred_check_branch
                %536 = sbr.rel (0) target = $region147
              $region146: #{_forward_arrays.1} parent=131 // pred_region
                loop: start=0, step=1, limit=1
                $region148: #{_forward_arrays.1} parent=146 // loop_pre_header
                  _
                $region149: #{_forward_arrays.1} parent=146 // loop_header
                  %s538 = sphi 0, %s542
                  %p539 = scmp.ge.s32.totalorder %s538, 1
                  %s543 = sphi %s506, %s506
                  %s544 = sphi %s514, %s514
                $region150: #{_forward_arrays.1} parent=146 // loop_header_branch
                  %541 = sbr.rel (%p539) target = $region154
                $region151: #{_forward_arrays.1} parent=146 // loop_body
                  %v545 = vld [vmem:[%s543] sm:$0xff]
                  %546 = vst [vmem:[%s544] sm:$0xff] %v545
                  %v547 = vld [vmem:[%s543 + $0x8] sm:$0xff]
                  %548 = vst [vmem:[%s544 + $0x18] sm:$0xff] %v547
                $region152: #{_forward_arrays.1} parent=146 // loop_footer
                  %s542 = sadd.s32 1, %s538
                $region153: #{_forward_arrays.1} parent=146 // loop_footer_branch
                  %537 = sbr.rel target = $region149
                $region154: #{_forward_arrays.1} parent=146 // loop_exit
                  _
              $region147: #{_forward_arrays.1} parent=131 // pred_fallthru
                _
              // Predicated region
              $region155: #{_forward_arrays.1} parent=131 // pred_check
                _
              $region156: #{_forward_arrays.1} parent=131 // pred_check_branch
                %550 = sbr.rel target = $region158
              $region157: #{_forward_arrays.1} parent=131 // pred_region
                _
              $region158: #{_forward_arrays.1} parent=131 // pred_fallthru
                _
            $region132: #{_forward_arrays.1} parent=127 // pred_fallthru
              _
            // Predicated region
            $region133: #{_forward_arrays.1} parent=127 // pred_check
              _
            $region134: #{_forward_arrays.1} parent=127 // pred_check_branch
              %520 = sbr.rel target = $region136
            $region135: #{_forward_arrays.1} parent=127 // pred_region
              %s522 = ssub.s32 256, 1
              loop: start=0, step=1, limit=1
              $region137: #{_forward_arrays.1} parent=135 // loop_pre_header
                _
              $region138: #{_forward_arrays.1} parent=135 // loop_header
                %s524 = sphi 0, %s528
                %p525 = scmp.ge.s32.totalorder %s524, 1
                %s529 = sphi %s506, %s506
                %s530 = sphi %s514, %s514
              $region139: #{_forward_arrays.1} parent=135 // loop_header_branch
                %527 = sbr.rel (%p525) target = $region143
              $region140: #{_forward_arrays.1} parent=135 // loop_body
                %v531 = vld [vmem:[%s529] sm:%s522]
                %532 = vst [vmem:[%s530] sm:%s522] %v531
                %v533 = vld [vmem:[%s529 + $0x8] sm:%s522]
                %534 = vst [vmem:[%s530 + $0x18] sm:%s522] %v533
              $region141: #{_forward_arrays.1} parent=135 // loop_footer
                %s528 = sadd.s32 1, %s524
              $region142: #{_forward_arrays.1} parent=135 // loop_footer_branch
                %523 = sbr.rel target = $region138
              $region143: #{_forward_arrays.1} parent=135 // loop_exit
                _
            $region136: #{_forward_arrays.1} parent=127 // pred_fallthru
              _
          $region128: #{_forward_arrays.1} parent=123 // pred_fallthru
            _
          %551 = vnop
        $region124: #{_forward_arrays.1} parent=111 // pred_fallthru
          _
        // Predicated region
        $region159: #{_forward_arrays.1} parent=111 // pred_check
          %p552 = pneg %p199
        $region160: #{_forward_arrays.1} parent=111 // pred_check_branch
          %554 = sbr.rel (%p552) target = $region162
        $region161: #{_forward_arrays.1} parent=111 // pred_region
          _
        $region162: #{_forward_arrays.1} parent=111 // pred_fallthru
          _
      $region112: #{_forward_arrays.1} parent=5 // pred_fallthru
        _
      %p555 = scmp.le.s32.totalorder 2, %s14
      // Predicated region
      $region163: #{_forward_arrays.1} parent=5 // pred_check
        %p556 = pneg %p555
      $region164: #{_forward_arrays.1} parent=5 // pred_check_branch
        %558 = sbr.rel (%p556) target = $region166
      $region165: #{_forward_arrays.1} parent=5 // pred_region
        %s559 = ssub.s32 %s14, 2
        // Predicated region
        $region167: #{_forward_arrays.1} parent=165 // pred_check
          %p560 = pneg %p179
        $region168: #{_forward_arrays.1} parent=165 // pred_check_branch
          %562 = sbr.rel (%p560) target = $region170
        $region169: #{_forward_arrays.1} parent=165 // pred_region
          %s563 = sand.u32 %s164, 1
          %s564 = sand.u32 %s164, 1
          %s565 = smul.addr %s564, 16
          %s566 = scalar_lea.vmem [#allocation4], %s565
        $region170: #{_forward_arrays.1} parent=165 // pred_fallthru
          _
        // Predicated region
        $region171: #{_forward_arrays.1} parent=165 // pred_check
          %p567 = pneg %p205
        $region172: #{_forward_arrays.1} parent=165 // pred_check_branch
          %569 = sbr.rel (%p567) target = $region174
        $region173: #{_forward_arrays.1} parent=165 // pred_region
          %p570 = scmp.lt.s32.totalorder %s20, 2
          %s571 = scalar_select %p570, %s20, 2
          %s572 = scalar_lea.vmem %s7, %s571
        $region174: #{_forward_arrays.1} parent=165 // pred_fallthru
          _
      $region166: #{_forward_arrays.1} parent=5 // pred_fallthru
        _
    $region6: #{_forward_arrays.1} parent=1 // loop_footer
      %s18 = sadd.s32 1, %s14
    $region7: #{_forward_arrays.1} parent=1 // loop_footer_branch
      %13 = sbr.rel target = $region3
    $region8: #{_forward_arrays.1} parent=1 // loop_exit
      _

</llo_original>
